<compile_context>
chip_gen: v6e
topology: v6e:2x2x1
jax: 0.10.0
libtpu: 0.0.40
codegen_flags: <defaults>
</compile_context>

<pallas_src>
import jax
import jax.numpy as jnp
from jax.experimental import pallas as pl
from jax.experimental.pallas import tpu as pltpu

PAD = 128                       # lane-padded hidden width (100 / 50 -> 128)
OUT_MINOR = 8                   # narrow output minor dim; lanes [0, OUT) valid
H1, H2, H3, H4, OUT = 100, 100, 50, 50, 2
NEG_INF = -1e30


# ----------------------------------------------------------------------------
# Kernel: whole forward pass (5 matmuls, ReLU, 8-lane masked log_softmax).
# ----------------------------------------------------------------------------
def classifier_kernel(x_ref,
                      w1_ref, b1_ref, w2_ref, b2_ref, w3_ref, b3_ref,
                      w4_ref, b4_ref, w5_ref, b5_ref,
                      out_ref):
    f32 = jnp.float32
    bf16 = jnp.bfloat16

    x = x_ref[...]                                             # (tb, D) bf16
    # hidden_1 .. hidden_4 : Linear -> ReLU (dropout == identity in eval mode).
    # bf16 MXU inputs, f32 accumulation; activations re-cast to bf16 between
    # layers so every dot stays on the native bf16 MXU path.
    h = jnp.maximum(jnp.dot(x, w1_ref[...], preferred_element_type=f32) + b1_ref[...], 0.0)
    h = jnp.maximum(jnp.dot(h.astype(bf16), w2_ref[...], preferred_element_type=f32) + b2_ref[...], 0.0)
    h = jnp.maximum(jnp.dot(h.astype(bf16), w3_ref[...], preferred_element_type=f32) + b3_ref[...], 0.0)
    h = jnp.maximum(jnp.dot(h.astype(bf16), w4_ref[...], preferred_element_type=f32) + b4_ref[...], 0.0)

    # output layer: narrow (tb, 8) logits; only lanes [0, OUT) are real classes
    logits = jnp.dot(h.astype(bf16), w5_ref[...], preferred_element_type=f32) + b5_ref[...]

    # masked, max-shifted log_softmax over the 8-lane minor dim
    lane = jax.lax.broadcasted_iota(jnp.int32, logits.shape, 1)
    masked = jnp.where(lane < OUT, logits, NEG_INF)
    m = jnp.max(masked, axis=1, keepdims=True)
    lse = jnp.log(jnp.sum(jnp.exp(masked - m), axis=1, keepdims=True)) + m

    # narrow (tb, 8) f32 store; wrapper slices the OUT valid class lanes.
    out_ref[...] = logits - lse


# ----------------------------------------------------------------------------
# Parameter preparation (done ONCE, not per forward call).
# ----------------------------------------------------------------------------
def _pad_w(w, rows, cols):
    out = jnp.zeros((rows, cols), jnp.bfloat16)
    return out.at[: w.shape[0], : w.shape[1]].set(w.astype(jnp.bfloat16))


def _pad_b(b, cols):
    out = jnp.zeros((1, cols), jnp.float32)
    return out.at[0, : b.shape[0]].set(b.astype(jnp.float32))


def prepare_params(params, input_size):
    """Pad + cast the 5 (W, b) pairs once; returns a flat tuple of 10 arrays."""
    flat = []
    n = len(params)
    for li, (w, b) in enumerate(params):
        rows = input_size if li == 0 else PAD        # w1 keeps K = D unpadded
        cols = OUT_MINOR if li == n - 1 else PAD     # last layer -> narrow 8
        flat.append(_pad_w(w, rows, cols))
        flat.append(_pad_b(b, cols))
    return tuple(flat)


# ----------------------------------------------------------------------------
# Tile picker: always a "large enough" tile, >= 2-4 parallel grid steps when
# the batch allows it; the batch is padded up to a tile multiple (never tb=B
# fallbacks or tiny tiles for awkward batch sizes).
# ----------------------------------------------------------------------------
def _round_up(n, m):
    return ((n + m - 1) // m) * m


def _pick_tb(B):
    if B <= 16:
        return _round_up(B, 8)                       # single step, tiny batch
    if B <= 128:
        return _round_up(pl.cdiv(B, 2), 8)           # >= 2 steps (v7x megacore)
    # medium / large: aim for >= 4 parallel steps, tile capped at 512 rows so
    # pipelining depth stays healthy and inter-layer f32 temporaries stay small
    return max(64, min(512, _round_up(pl.cdiv(B, 4), 8)))


def _input_spec(tb, D, steps):
    if steps >= 4:
        try:
            # 3-deep buffering keeps the input DMA from being exposed between
            # very short per-step compute bodies; costs only tb*D*2 bytes.
            return pl.BlockSpec((tb, D), lambda i: (i, 0),
                                pipeline_mode=pl.Buffered(3))
        except Exception:
            pass
    return pl.BlockSpec((tb, D), lambda i: (i, 0))


# ----------------------------------------------------------------------------
# Forward wrapper.
# ----------------------------------------------------------------------------
def classifier_forward(x, prepared, *, tb=None):
    """x: (B, input_size) float; prepared: output of prepare_params()."""
    B, D = x.shape
    if tb is None:
        tb = _pick_tb(B)
    tb = _round_up(tb, 8)
    B_pad = _round_up(B, tb)
    steps = B_pad // tb

    # Input streamed un-padded in the lane dim (block last dim == full array
    # dim, legal) and in bf16 to halve the dominant HBM input stream.
    x_bf = x.astype(jnp.bfloat16)
    if B_pad != B:
        x_bf = jnp.pad(x_bf, ((0, B_pad - B), (0, 0)))

    in_specs = [_input_spec(tb, D, steps)]
    for arr in prepared:
        # weights / biases: one constant block, fetched once, resident in VMEM
        in_specs.append(pl.BlockSpec(arr.shape, lambda i: (0, 0)))

    out = pl.pallas_call(
        classifier_kernel,
        out_shape=jax.ShapeDtypeStruct((B_pad, OUT_MINOR), jnp.float32),
        grid_spec=pltpu.PrefetchScalarGridSpec(
            num_scalar_prefetch=0,
            grid=(steps,),
            in_specs=in_specs,
            out_specs=pl.BlockSpec((tb, OUT_MINOR), lambda i: (i, 0)),
        ),
        compiler_params=pltpu.CompilerParams(
            dimension_semantics=("parallel",),
            vmem_limit_bytes=32 * 1024 * 1024,
        ),
    )(x_bf, *prepared)

    return out[:B, :OUT]


# ----------------------------------------------------------------------------
# Deterministic parameter init (PyTorch nn.Linear default: U(-1/sqrt(fan_in), +))
# ----------------------------------------------------------------------------
def init_params(key, input_size):
    dims = [(input_size, H1), (H1, H2), (H2, H3), (H3, H4), (H4, OUT)]
    params = []
    for fan_in, fan_out in dims:
        key, kw, kb = jax.random.split(key, 3)
        bound = 1.0 / jnp.sqrt(fan_in)
        w = jax.random.uniform(kw, (fan_in, fan_out), jnp.float32, -bound, bound)
        b = jax.random.uniform(kb, (fan_out,), jnp.float32, -bound, bound)
        params.append((w, b))
    return params


def reference_forward(x, params):
    # Mirrors the kernel's numerics: bf16 matmul inputs, f32 accumulation.
    h = x.astype(jnp.bfloat16)
    for (w, b) in params[:-1]:
        h = jnp.maximum(
            jnp.dot(h, w.astype(jnp.bfloat16), preferred_element_type=jnp.float32) + b, 0.0)
        h = h.astype(jnp.bfloat16)                   # dropout = identity (eval)
    w, b = params[-1]
    logits = jnp.dot(h, w.astype(jnp.bfloat16), preferred_element_type=jnp.float32) + b
    return jax.nn.log_softmax(logits, axis=1)


if __name__ == "__main__":
    key = jax.random.PRNGKey(0)
    B, input_size = 16, 32
    key, kx = jax.random.split(key)
    x = jax.random.normal(kx, (B, input_size), jnp.float32)
    params = init_params(key, input_size)
    prepared = prepare_params(params, input_size)      # pad/cast ONCE

    out = classifier_forward(x, prepared)
    out = jax.block_until_ready(out)

    ref = reference_forward(x, params)
    assert out.shape == (B, OUT)
    assert jnp.allclose(out, ref, atol=2e-3, rtol=2e-3), "mismatch vs JAX reference"

    print("KERNEL_OK")
</pallas_src>

<mosaic_0001>
module attributes {stable_mosaic.version = 11 : i64} {
  func.func @classifier_kernel(%arg0: i32, %arg1: memref<16x32xbf16, #tpu.memory_space<vmem>>, %arg2: memref<32x128xbf16, #tpu.memory_space<vmem>>, %arg3: memref<1x128xf32, #tpu.memory_space<vmem>>, %arg4: memref<128x128xbf16, #tpu.memory_space<vmem>>, %arg5: memref<1x128xf32, #tpu.memory_space<vmem>>, %arg6: memref<128x128xbf16, #tpu.memory_space<vmem>>, %arg7: memref<1x128xf32, #tpu.memory_space<vmem>>, %arg8: memref<128x128xbf16, #tpu.memory_space<vmem>>, %arg9: memref<1x128xf32, #tpu.memory_space<vmem>>, %arg10: memref<128x8xbf16, #tpu.memory_space<vmem>>, %arg11: memref<1x8xf32, #tpu.memory_space<vmem>>, %arg12: memref<16x8xf32, #tpu.memory_space<vmem>>) attributes {dimension_semantics = [#tpu.dimension_semantics<parallel>], iteration_bounds = array<i64: 1>, scalar_prefetch = 0 : i64, scratch_operands = 0 : i64, tpu.core_type = #tpu.core_type<tc>, window_params = [{transform_indices = @transform_0, window_bounds = array<i64: 16, 32>}, {pipeline_mode = #tpu.pipeline_mode<synchronous>, transform_indices = @transform_1, window_bounds = array<i64: 32, 128>}, {pipeline_mode = #tpu.pipeline_mode<synchronous>, transform_indices = @transform_2, window_bounds = array<i64: 1, 128>}, {pipeline_mode = #tpu.pipeline_mode<synchronous>, transform_indices = @transform_3, window_bounds = array<i64: 128, 128>}, {pipeline_mode = #tpu.pipeline_mode<synchronous>, transform_indices = @transform_4, window_bounds = array<i64: 1, 128>}, {pipeline_mode = #tpu.pipeline_mode<synchronous>, transform_indices = @transform_5, window_bounds = array<i64: 128, 128>}, {pipeline_mode = #tpu.pipeline_mode<synchronous>, transform_indices = @transform_6, window_bounds = array<i64: 1, 128>}, {pipeline_mode = #tpu.pipeline_mode<synchronous>, transform_indices = @transform_7, window_bounds = array<i64: 128, 128>}, {pipeline_mode = #tpu.pipeline_mode<synchronous>, transform_indices = @transform_8, window_bounds = array<i64: 1, 128>}, {pipeline_mode = #tpu.pipeline_mode<synchronous>, transform_indices = @transform_9, window_bounds = array<i64: 128, 8>}, {pipeline_mode = #tpu.pipeline_mode<synchronous>, transform_indices = @transform_10, window_bounds = array<i64: 1, 8>}, {transform_indices = @transform_11, window_bounds = array<i64: 16, 8>}]} {
    %c0 = arith.constant 0 : index
    %c0_0 = arith.constant 0 : index
    %0 = vector.load %arg1[%c0, %c0_0] : memref<16x32xbf16, #tpu.memory_space<vmem>>, vector<16x32xbf16>
    %c0_1 = arith.constant 0 : index
    %c0_2 = arith.constant 0 : index
    %1 = vector.load %arg2[%c0_1, %c0_2] : memref<32x128xbf16, #tpu.memory_space<vmem>>, vector<32x128xbf16>
    %cst = arith.constant dense<0.000000e+00> : vector<16x128xf32>
    %2 = tpu.matmul %0, %1, %cst {dimension_numbers = #tpu.dot_dimension_numbers<[1], [0], [0], [1], [0, 0, 1, 1], [], []>} : vector<16x32xbf16>, vector<32x128xbf16>, vector<16x128xf32> -> vector<16x128xf32>
    %c0_3 = arith.constant 0 : index
    %c0_4 = arith.constant 0 : index
    %3 = vector.load %arg3[%c0_3, %c0_4] : memref<1x128xf32, #tpu.memory_space<vmem>>, vector<1x128xf32>
    %4 = vector.broadcast %3 : vector<1x128xf32> to vector<16x128xf32>
    %5 = arith.addf %2, %4 : vector<16x128xf32>
    %cst_5 = arith.constant 0.000000e+00 : f32
    %6 = vector.broadcast %cst_5 : f32 to vector<16x128xf32>
    %7 = arith.maximumf %5, %6 : vector<16x128xf32>
    %8 = arith.truncf %7 : vector<16x128xf32> to vector<16x128xbf16>
    %c0_6 = arith.constant 0 : index
    %c0_7 = arith.constant 0 : index
    %9 = vector.load %arg4[%c0_6, %c0_7] : memref<128x128xbf16, #tpu.memory_space<vmem>>, vector<128x128xbf16>
    %cst_8 = arith.constant dense<0.000000e+00> : vector<16x128xf32>
    %10 = tpu.matmul %8, %9, %cst_8 {dimension_numbers = #tpu.dot_dimension_numbers<[1], [0], [0], [1], [0, 0, 1, 1], [], []>} : vector<16x128xbf16>, vector<128x128xbf16>, vector<16x128xf32> -> vector<16x128xf32>
    %c0_9 = arith.constant 0 : index
    %c0_10 = arith.constant 0 : index
    %11 = vector.load %arg5[%c0_9, %c0_10] : memref<1x128xf32, #tpu.memory_space<vmem>>, vector<1x128xf32>
    %12 = vector.broadcast %11 : vector<1x128xf32> to vector<16x128xf32>
    %13 = arith.addf %10, %12 : vector<16x128xf32>
    %cst_11 = arith.constant 0.000000e+00 : f32
    %14 = vector.broadcast %cst_11 : f32 to vector<16x128xf32>
    %15 = arith.maximumf %13, %14 : vector<16x128xf32>
    %16 = arith.truncf %15 : vector<16x128xf32> to vector<16x128xbf16>
    %c0_12 = arith.constant 0 : index
    %c0_13 = arith.constant 0 : index
    %17 = vector.load %arg6[%c0_12, %c0_13] : memref<128x128xbf16, #tpu.memory_space<vmem>>, vector<128x128xbf16>
    %cst_14 = arith.constant dense<0.000000e+00> : vector<16x128xf32>
    %18 = tpu.matmul %16, %17, %cst_14 {dimension_numbers = #tpu.dot_dimension_numbers<[1], [0], [0], [1], [0, 0, 1, 1], [], []>} : vector<16x128xbf16>, vector<128x128xbf16>, vector<16x128xf32> -> vector<16x128xf32>
    %c0_15 = arith.constant 0 : index
    %c0_16 = arith.constant 0 : index
    %19 = vector.load %arg7[%c0_15, %c0_16] : memref<1x128xf32, #tpu.memory_space<vmem>>, vector<1x128xf32>
    %20 = vector.broadcast %19 : vector<1x128xf32> to vector<16x128xf32>
    %21 = arith.addf %18, %20 : vector<16x128xf32>
    %cst_17 = arith.constant 0.000000e+00 : f32
    %22 = vector.broadcast %cst_17 : f32 to vector<16x128xf32>
    %23 = arith.maximumf %21, %22 : vector<16x128xf32>
    %24 = arith.truncf %23 : vector<16x128xf32> to vector<16x128xbf16>
    %c0_18 = arith.constant 0 : index
    %c0_19 = arith.constant 0 : index
    %25 = vector.load %arg8[%c0_18, %c0_19] : memref<128x128xbf16, #tpu.memory_space<vmem>>, vector<128x128xbf16>
    %cst_20 = arith.constant dense<0.000000e+00> : vector<16x128xf32>
    %26 = tpu.matmul %24, %25, %cst_20 {dimension_numbers = #tpu.dot_dimension_numbers<[1], [0], [0], [1], [0, 0, 1, 1], [], []>} : vector<16x128xbf16>, vector<128x128xbf16>, vector<16x128xf32> -> vector<16x128xf32>
    %c0_21 = arith.constant 0 : index
    %c0_22 = arith.constant 0 : index
    %27 = vector.load %arg9[%c0_21, %c0_22] : memref<1x128xf32, #tpu.memory_space<vmem>>, vector<1x128xf32>
    %28 = vector.broadcast %27 : vector<1x128xf32> to vector<16x128xf32>
    %29 = arith.addf %26, %28 : vector<16x128xf32>
    %cst_23 = arith.constant 0.000000e+00 : f32
    %30 = vector.broadcast %cst_23 : f32 to vector<16x128xf32>
    %31 = arith.maximumf %29, %30 : vector<16x128xf32>
    %32 = arith.truncf %31 : vector<16x128xf32> to vector<16x128xbf16>
    %c0_24 = arith.constant 0 : index
    %c0_25 = arith.constant 0 : index
    %33 = vector.load %arg10[%c0_24, %c0_25] : memref<128x8xbf16, #tpu.memory_space<vmem>>, vector<128x8xbf16>
    %cst_26 = arith.constant dense<0.000000e+00> : vector<16x8xf32>
    %34 = tpu.matmul %32, %33, %cst_26 {dimension_numbers = #tpu.dot_dimension_numbers<[1], [0], [0], [1], [0, 0, 1, 1], [], []>} : vector<16x128xbf16>, vector<128x8xbf16>, vector<16x8xf32> -> vector<16x8xf32>
    %c0_27 = arith.constant 0 : index
    %c0_28 = arith.constant 0 : index
    %35 = vector.load %arg11[%c0_27, %c0_28] : memref<1x8xf32, #tpu.memory_space<vmem>>, vector<1x8xf32>
    %36 = vector.broadcast %35 : vector<1x8xf32> to vector<16x8xf32>
    %37 = arith.addf %34, %36 : vector<16x8xf32>
    %38 = tpu.iota {dimensions = array<i32: 1>} : vector<16x8xi32>
    %c2_i32 = arith.constant 2 : i32
    %39 = vector.broadcast %c2_i32 : i32 to vector<16x8xi32>
    %40 = arith.cmpi slt, %38, %39 : vector<16x8xi32>
    %cst_29 = arith.constant -1.000000e+30 : f32
    %41 = vector.broadcast %cst_29 : f32 to vector<16x8xf32>
    %42 = arith.select %40, %37, %41 : vector<16x8xi1>, vector<16x8xf32>
    %cst_30 = arith.constant dense<0xFF800000> : vector<16xf32>
    %43 = vector.multi_reduction <maximumf>, %42, %cst_30 [1] : vector<16x8xf32> to vector<16xf32>
    %44 = vector.shape_cast %43 : vector<16xf32> to vector<16x1xf32>
    %45 = vector.broadcast %44 : vector<16x1xf32> to vector<16x8xf32>
    %46 = arith.subf %42, %45 : vector<16x8xf32>
    %47 = math.exp %46 : vector<16x8xf32>
    %cst_31 = arith.constant dense<0.000000e+00> : vector<16xf32>
    %48 = vector.multi_reduction <add>, %47, %cst_31 [1] : vector<16x8xf32> to vector<16xf32>
    %49 = vector.shape_cast %48 : vector<16xf32> to vector<16x1xf32>
    %50 = math.log %49 : vector<16x1xf32>
    %51 = arith.addf %50, %44 : vector<16x1xf32>
    %52 = vector.broadcast %51 : vector<16x1xf32> to vector<16x8xf32>
    %53 = arith.subf %37, %52 : vector<16x8xf32>
    %c0_32 = arith.constant 0 : index
    %c0_33 = arith.constant 0 : index
    %54 = vector.load %arg12[%c0_32, %c0_33] : memref<16x8xf32, #tpu.memory_space<vmem>>, vector<16x8xf32>
    tpu.vector_store %arg12[%c0_32, %c0_33], %53 {strides = array<i32>} : memref<16x8xf32, #tpu.memory_space<vmem>>, vector<16x8xf32>,
    return
  }
  func.func @transform_0(%arg0: i32) -> (i32, i32) {
    %c0_i32 = arith.constant 0 : i32
    %c0_i32_0 = arith.constant 0 : i32
    return %arg0, %c0_i32 : i32, i32
  }
  func.func @transform_1(%arg0: i32) -> (i32, i32) {
    %c0_i32 = arith.constant 0 : i32
    %c0_i32_0 = arith.constant 0 : i32
    %c0_i32_1 = arith.constant 0 : i32
    return %c0_i32, %c0_i32_0 : i32, i32
  }
  func.func @transform_2(%arg0: i32) -> (i32, i32) {
    %c0_i32 = arith.constant 0 : i32
    %c0_i32_0 = arith.constant 0 : i32
    %c0_i32_1 = arith.constant 0 : i32
    return %c0_i32, %c0_i32_0 : i32, i32
  }
  func.func @transform_3(%arg0: i32) -> (i32, i32) {
    %c0_i32 = arith.constant 0 : i32
    %c0_i32_0 = arith.constant 0 : i32
    %c0_i32_1 = arith.constant 0 : i32
    return %c0_i32, %c0_i32_0 : i32, i32
  }
  func.func @transform_4(%arg0: i32) -> (i32, i32) {
    %c0_i32 = arith.constant 0 : i32
    %c0_i32_0 = arith.constant 0 : i32
    %c0_i32_1 = arith.constant 0 : i32
    return %c0_i32, %c0_i32_0 : i32, i32
  }
  func.func @transform_5(%arg0: i32) -> (i32, i32) {
    %c0_i32 = arith.constant 0 : i32
    %c0_i32_0 = arith.constant 0 : i32
    %c0_i32_1 = arith.constant 0 : i32
    return %c0_i32, %c0_i32_0 : i32, i32
  }
  func.func @transform_6(%arg0: i32) -> (i32, i32) {
    %c0_i32 = arith.constant 0 : i32
    %c0_i32_0 = arith.constant 0 : i32
    %c0_i32_1 = arith.constant 0 : i32
    return %c0_i32, %c0_i32_0 : i32, i32
  }
  func.func @transform_7(%arg0: i32) -> (i32, i32) {
    %c0_i32 = arith.constant 0 : i32
    %c0_i32_0 = arith.constant 0 : i32
    %c0_i32_1 = arith.constant 0 : i32
    return %c0_i32, %c0_i32_0 : i32, i32
  }
  func.func @transform_8(%arg0: i32) -> (i32, i32) {
    %c0_i32 = arith.constant 0 : i32
    %c0_i32_0 = arith.constant 0 : i32
    %c0_i32_1 = arith.constant 0 : i32
    return %c0_i32, %c0_i32_0 : i32, i32
  }
  func.func @transform_9(%arg0: i32) -> (i32, i32) {
    %c0_i32 = arith.constant 0 : i32
    %c0_i32_0 = arith.constant 0 : i32
    %c0_i32_1 = arith.constant 0 : i32
    return %c0_i32, %c0_i32_0 : i32, i32
  }
  func.func @transform_10(%arg0: i32) -> (i32, i32) {
    %c0_i32 = arith.constant 0 : i32
    %c0_i32_0 = arith.constant 0 : i32
    %c0_i32_1 = arith.constant 0 : i32
    return %c0_i32, %c0_i32_0 : i32, i32
  }
  func.func @transform_11(%arg0: i32) -> (i32, i32) {
    %c0_i32 = arith.constant 0 : i32
    %c0_i32_0 = arith.constant 0 : i32
    return %arg0, %c0_i32 : i32, i32
  }
}

</mosaic_0001>

<llo_original>
// kernel: tpu_custom_call.1
$region0: #{tpu_custom_call.1}
  #allocation0 [shape = 'u32[]', space=smem, size = 0x4, offset = 0x4, fixed_abs, tag = 'smem constant byte address 0x4 - core index']
  #allocation1 [shape = 'u32[144,128]{1,0:T(1,128)}', space=vmem, size = 0x12000, scoped, tag = 'internal scratch']
  %s0 = inlined_call_operand.vmem [shape: bf16[16,32], index: 0, kind: input, shape index: {}]
  %s1 = inlined_call_operand.hbm [shape: bf16[32,128], index: 1, kind: input, shape index: {}]
  %s2 = inlined_call_operand.vmem [shape: f32[1,128], index: 2, kind: input, shape index: {}]
  %s3 = inlined_call_operand.vmem [shape: bf16[128,128], index: 3, kind: input, shape index: {}]
  %s4 = inlined_call_operand.hbm [shape: f32[1,128], index: 4, kind: input, shape index: {}]
  %s5 = inlined_call_operand.hbm [shape: bf16[128,128], index: 5, kind: input, shape index: {}]
  %s6 = inlined_call_operand.vmem [shape: f32[1,128], index: 6, kind: input, shape index: {}]
  %s7 = inlined_call_operand.hbm [shape: bf16[128,128], index: 7, kind: input, shape index: {}]
  %s8 = inlined_call_operand.vmem [shape: f32[1,128], index: 8, kind: input, shape index: {}]
  %s9 = inlined_call_operand.vmem [shape: bf16[128,8], index: 9, kind: input, shape index: {}]
  %s10 = inlined_call_operand.vmem [shape: f32[1,8], index: 10, kind: input, shape index: {}]
  %s11 = inlined_call_operand.vmem [shape: f32[16,8], index: 11, kind: output, shape index: {}]
  %s12 = sld [smem:[#allocation0]]
  $region70: #{tpu_custom_call.1} parent=0
    _
  %s14 = ssub.s32 1, %s12
  %s15 = scalar_select 0, %s14, %s12
  $region1: #{tpu_custom_call.1} parent=0
    #allocation2 [shape = 'u8[8192]{0}', space=vmem, size = 0x2000, scoped, tag = 'input window, operand 1, single buffered']
    #allocation3 [shape = 's32[1]{0}', space=sflag, size = 0x4, scoped, tag = 'scoped memory for tpu_custom_call.1']
    #allocation4 [shape = 'u8[512]{0}', space=vmem, size = 0x400, scoped, tag = 'input window, operand 4, single buffered']
    #allocation5 [shape = 's32[1]{0}', space=sflag, size = 0x4, scoped, tag = 'scoped memory for tpu_custom_call.1']
    #allocation6 [shape = 'u8[32768]{0}', space=vmem, size = 0x8000, scoped, tag = 'input window, operand 5, single buffered']
    #allocation7 [shape = 'u8[32768]{0}', space=vmem, size = 0x8000, scoped, tag = 'input window, operand 7, single buffered']
    #allocation8 [shape = 's32[1]{0}', space=sflag, size = 0x4, scoped, tag = 'scoped memory for tpu_custom_call.1']
    %16 = vsyncpa [#allocation3], 0
    %17 = vsyncpa [#allocation5], 0
    %18 = vsyncpa [#allocation8], 0
    // Predicated region
    $region2: #{tpu_custom_call.1} parent=1 // pred_check
      _
    $region3: #{tpu_custom_call.1} parent=1 // pred_check_branch
      %20 = sbr.rel (0) target = $region5
    $region4: #{tpu_custom_call.1} parent=1 // pred_region
      _
    $region5: #{tpu_custom_call.1} parent=1 // pred_fallthru
      _
    // Predicated region
    $region6: #{tpu_custom_call.1} parent=1 // pred_check
      _
    $region7: #{tpu_custom_call.1} parent=1 // pred_check_branch
      %22 = sbr.rel (0) target = $region9
    $region8: #{tpu_custom_call.1} parent=1 // pred_region
      %s24 = ssub.s32 256, 256
      %25 = vsyncadd [#allocation3], %s24
      %s26 = sshll.u32 [#allocation2], 4
      %s27 = int_to_ptr.vmem [resolvable:$true] %s26
      %32 = dma.hbm_to_vmem [thread:$0]  %s1, 256, %s27, [#allocation3], 64, 64, 4
    $region9: #{tpu_custom_call.1} parent=1 // pred_fallthru
      _
    // Predicated region
    $region10: #{tpu_custom_call.1} parent=1 // pred_check
      _
    $region11: #{tpu_custom_call.1} parent=1 // pred_check_branch
      %34 = sbr.rel (0) target = $region13
    $region12: #{tpu_custom_call.1} parent=1 // pred_region
      _
    $region13: #{tpu_custom_call.1} parent=1 // pred_fallthru
      _
    // Predicated region
    $region14: #{tpu_custom_call.1} parent=1 // pred_check
      _
    $region15: #{tpu_custom_call.1} parent=1 // pred_check_branch
      %36 = sbr.rel (0) target = $region17
    $region16: #{tpu_custom_call.1} parent=1 // pred_region
      _
    $region17: #{tpu_custom_call.1} parent=1 // pred_fallthru
      _
    // Predicated region
    $region18: #{tpu_custom_call.1} parent=1 // pred_check
      _
    $region19: #{tpu_custom_call.1} parent=1 // pred_check_branch
      %38 = sbr.rel (0) target = $region21
    $region20: #{tpu_custom_call.1} parent=1 // pred_region
      %s40 = ssub.s32 16, 16
      %41 = vsyncadd [#allocation5], %s40
      %s43 = sshll.u32 [#allocation4], 4
      %s44 = int_to_ptr.vmem [resolvable:$true] %s43
      %46 = dma.hbm_to_vmem [thread:$0]  %s4, 16, %s44, [#allocation5]
    $region21: #{tpu_custom_call.1} parent=1 // pred_fallthru
      _
    // Predicated region
    $region22: #{tpu_custom_call.1} parent=1 // pred_check
      _
    $region23: #{tpu_custom_call.1} parent=1 // pred_check_branch
      %48 = sbr.rel (0) target = $region25
    $region24: #{tpu_custom_call.1} parent=1 // pred_region
      %s50 = ssub.s32 1024, 1024
      %51 = vsyncadd [#allocation5], %s50
      %s52 = sshll.u32 [#allocation6], 4
      %s53 = int_to_ptr.vmem [resolvable:$true] %s52
      %58 = dma.hbm_to_vmem [thread:$0]  %s5, 1024, %s53, [#allocation5], 64, 64, 4
    $region25: #{tpu_custom_call.1} parent=1 // pred_fallthru
      _
    // Predicated region
    $region26: #{tpu_custom_call.1} parent=1 // pred_check
      _
    $region27: #{tpu_custom_call.1} parent=1 // pred_check_branch
      %60 = sbr.rel (0) target = $region29
    $region28: #{tpu_custom_call.1} parent=1 // pred_region
      _
    $region29: #{tpu_custom_call.1} parent=1 // pred_fallthru
      _
    // Predicated region
    $region30: #{tpu_custom_call.1} parent=1 // pred_check
      _
    $region31: #{tpu_custom_call.1} parent=1 // pred_check_branch
      %62 = sbr.rel (0) target = $region33
    $region32: #{tpu_custom_call.1} parent=1 // pred_region
      %s64 = ssub.s32 1024, 1024
      %65 = vsyncadd [#allocation8], %s64
      %s66 = sshll.u32 [#allocation7], 4
      %s67 = int_to_ptr.vmem [resolvable:$true] %s66
      %72 = dma.hbm_to_vmem [thread:$0]  %s7, 1024, %s67, [#allocation8], 64, 64, 4
    $region33: #{tpu_custom_call.1} parent=1 // pred_fallthru
      _
    // Predicated region
    $region34: #{tpu_custom_call.1} parent=1 // pred_check
      _
    $region35: #{tpu_custom_call.1} parent=1 // pred_check_branch
      %74 = sbr.rel (0) target = $region37
    $region36: #{tpu_custom_call.1} parent=1 // pred_region
      _
    $region37: #{tpu_custom_call.1} parent=1 // pred_fallthru
      _
    // Predicated region
    $region38: #{tpu_custom_call.1} parent=1 // pred_check
      _
    $region39: #{tpu_custom_call.1} parent=1 // pred_check_branch
      %76 = sbr.rel (0) target = $region41
    $region40: #{tpu_custom_call.1} parent=1 // pred_region
      _
    $region41: #{tpu_custom_call.1} parent=1 // pred_fallthru
      _
    // Predicated region
    $region42: #{tpu_custom_call.1} parent=1 // pred_check
      _
    $region43: #{tpu_custom_call.1} parent=1 // pred_check_branch
      %78 = sbr.rel (0) target = $region45
    $region44: #{tpu_custom_call.1} parent=1 // pred_region
      _
    $region45: #{tpu_custom_call.1} parent=1 // pred_fallthru
      _
    // Predicated region
    $region46: #{tpu_custom_call.1} parent=1 // pred_check
      _
    $region47: #{tpu_custom_call.1} parent=1 // pred_check_branch
      %80 = sbr.rel (0) target = $region49
    $region48: #{tpu_custom_call.1} parent=1 // pred_region
      %81 = dma.done [#allocation3], 256
    $region49: #{tpu_custom_call.1} parent=1 // pred_fallthru
      _
    // Predicated region
    $region50: #{tpu_custom_call.1} parent=1 // pred_check
      _
    $region51: #{tpu_custom_call.1} parent=1 // pred_check_branch
      %83 = sbr.rel (0) target = $region53
    $region52: #{tpu_custom_call.1} parent=1 // pred_region
      %84 = dma.done [#allocation5], 16
    $region53: #{tpu_custom_call.1} parent=1 // pred_fallthru
      _
    // Predicated region
    $region54: #{tpu_custom_call.1} parent=1 // pred_check
      _
    $region55: #{tpu_custom_call.1} parent=1 // pred_check_branch
      %86 = sbr.rel (0) target = $region57
    $region56: #{tpu_custom_call.1} parent=1 // pred_region
      %87 = dma.done [#allocation5], 1024
    $region57: #{tpu_custom_call.1} parent=1 // pred_fallthru
      _
    // Predicated region
    $region58: #{tpu_custom_call.1} parent=1 // pred_check
      _
    $region59: #{tpu_custom_call.1} parent=1 // pred_check_branch
      %89 = sbr.rel (0) target = $region61
    $region60: #{tpu_custom_call.1} parent=1 // pred_region
      %90 = dma.done [#allocation8], 1024
    $region61: #{tpu_custom_call.1} parent=1 // pred_fallthru
      _
    %v92 = vld [vmem:[%s0] sm:$0xf]
    %v93 = vld [vmem:[%s0 + $0x4] sm:$0xf]
    %v94 = vld [vmem:[#allocation2] sm:$0xf]
    %v95 = vld [vmem:[#allocation2 + $0x4] sm:$0xf]
    %v96 = vld [vmem:[#allocation2 + $0x8] sm:$0xf]
    %v97 = vld [vmem:[#allocation2 + $0xc] sm:$0xf]
    %v98 = vld [vmem:[%s2] sm:$0x1]
    %v100 = vlaneseq
    %v101 = vshrl.u32 %v100, 7
    %v102 = vsub.s32 0, %v101
    %v103 = vrot.slane %v98, %v102
    %v107 = vunpack.c.l.b16 %v92
    %v108 = vunpack.c.l.b16 %v93
    %v109 = vpack.c.b16 %v108, %v107
    %v114 = vunpack.c.l.b16 %v94
    %v115 = vunpack.c.l.b16 %v95
    %v116 = vunpack.c.l.b16 %v96
    %v117 = vunpack.c.l.b16 %v97
    %v118 = vpack.c.b16 %v115, %v114
    %v119 = vpack.c.b16 %v117, %v116
    %vm122 = vcmask 261120
    %v124 = vsel %vm122, %v109, 0
    %126 = vmatprep.subr.bf16.mxu0 0
    %127 = vmatpush1.bf16.msra.mxu0 0
    %128 = vmatprep.subr.bf16.mxu0 0
    %129 = vmatpush1.bf16.msra.mxu0 0
    %130 = vmatprep.subr.bf16.mxu0 0
    %131 = vmatpush1.bf16.msra.mxu0 0
    %132 = vmatprep.subr.bf16.mxu0 0
    %133 = vmatpush1.bf16.msra.mxu0 0
    %134 = vmatprep.subr.bf16.mxu0 0
    %135 = vmatpush1.bf16.msra.mxu0 0
    %136 = vmatprep.subr.bf16.mxu0 0
    %137 = vmatpush1.bf16.msra.mxu0 0
    %138 = vmatprep.subr.bf16.mxu0 0
    %139 = vmatpush1.bf16.msra.mxu0 %v119
    %140 = vmatprep.subr.bf16.mxu0 0
    %141 = vmatpush1.bf16.msra.mxu0 %v118
    %142 = vmatprep.subr.bf16.mxu0 0
    %143 = vmatpush2.bf16.msra.mxu0 0
    %144 = vmatprep.subr.bf16.mxu0 0
    %145 = vmatpush2.bf16.msra.mxu0 0
    %146 = vmatprep.subr.bf16.mxu0 0
    %147 = vmatpush2.bf16.msra.mxu0 0
    %148 = vmatprep.subr.bf16.mxu0 0
    %149 = vmatpush2.bf16.msra.mxu0 0
    %150 = vmatprep.subr.bf16.mxu0 0
    %151 = vmatpush2.bf16.msra.mxu0 0
    %152 = vmatprep.subr.bf16.mxu0 0
    %153 = vmatpush2.bf16.msra.mxu0 0
    %154 = vmatprep.subr.bf16.mxu0 0
    %155 = vmatpush2.bf16.msra.mxu0 0
    %156 = vmatprep.subr.bf16.mxu0 0
    %157 = vmatpush2.bf16.msra.mxu0 0
    %158 = vmatprep.mubr.bf16.mxu0 0
    %159 = vmatmul.mubr.bf16.gmra.mxu0 %v124
    %v160 = vpop.f32.mrf.mxu0
    %v161 = vadd.f32 %v103, %v160
    %v162 = vpop.f32.mrf.mxu0
    %v163 = vpop.f32.mrf.mxu0
    %v164 = vadd.f32 %v103, %v163
    %v165 = vpop.f32.mrf.mxu0
    %166 = vdwg.mxu0
    %v167 = vmax.f32 %v161, 0.0
    %v168 = vmax.f32 %v164, 0.0
    %v169 = vpack.c.bf16 %v168, %v167
    %v170 = vld [vmem:[%s3] sm:$0xf]
    %v171 = vld [vmem:[%s3 + $0x4] sm:$0xf]
    %v172 = vld [vmem:[%s3 + $0x8] sm:$0xf]
    %v173 = vld [vmem:[%s3 + $0xc] sm:$0xf]
    %v174 = vld [vmem:[%s3 + $0x10] sm:$0xf]
    %v175 = vld [vmem:[%s3 + $0x14] sm:$0xf]
    %v176 = vld [vmem:[%s3 + $0x18] sm:$0xf]
    %v177 = vld [vmem:[%s3 + $0x1c] sm:$0xf]
    %v178 = vld [vmem:[%s3 + $0x20] sm:$0xf]
    %v179 = vld [vmem:[%s3 + $0x24] sm:$0xf]
    %v180 = vld [vmem:[%s3 + $0x28] sm:$0xf]
    %v181 = vld [vmem:[%s3 + $0x2c] sm:$0xf]
    %v182 = vld [vmem:[%s3 + $0x30] sm:$0xf]
    %v183 = vld [vmem:[%s3 + $0x34] sm:$0xf]
    %v184 = vld [vmem:[%s3 + $0x38] sm:$0xf]
    %v185 = vld [vmem:[%s3 + $0x3c] sm:$0xf]
    %v186 = vld [vmem:[#allocation4] sm:$0x1]
    %v188 = vlaneseq
    %v189 = vshrl.u32 %v188, 7
    %v190 = vsub.s32 0, %v189
    %v191 = vrot.slane %v186, %v190
    %v209 = vunpack.c.l.b16 %v170
    %v210 = vunpack.c.l.b16 %v171
    %v211 = vunpack.c.l.b16 %v172
    %v212 = vunpack.c.l.b16 %v173
    %v213 = vunpack.c.l.b16 %v174
    %v214 = vunpack.c.l.b16 %v175
    %v215 = vunpack.c.l.b16 %v176
    %v216 = vunpack.c.l.b16 %v177
    %v217 = vunpack.c.l.b16 %v178
    %v218 = vunpack.c.l.b16 %v179
    %v219 = vunpack.c.l.b16 %v180
    %v220 = vunpack.c.l.b16 %v181
    %v221 = vunpack.c.l.b16 %v182
    %v222 = vunpack.c.l.b16 %v183
    %v223 = vunpack.c.l.b16 %v184
    %v224 = vunpack.c.l.b16 %v185
    %v225 = vpack.c.b16 %v210, %v209
    %v226 = vpack.c.b16 %v212, %v211
    %v227 = vpack.c.b16 %v214, %v213
    %v228 = vpack.c.b16 %v216, %v215
    %v229 = vpack.c.b16 %v218, %v217
    %v230 = vpack.c.b16 %v220, %v219
    %v231 = vpack.c.b16 %v222, %v221
    %v232 = vpack.c.b16 %v224, %v223
    %241 = vmatprep.subr.bf16.mxu0 0
    %242 = vmatpush1.bf16.msra.mxu0 %v232
    %243 = vmatprep.subr.bf16.mxu0 0
    %244 = vmatpush1.bf16.msra.mxu0 %v231
    %245 = vmatprep.subr.bf16.mxu0 0
    %246 = vmatpush1.bf16.msra.mxu0 %v230
    %247 = vmatprep.subr.bf16.mxu0 0
    %248 = vmatpush1.bf16.msra.mxu0 %v229
    %249 = vmatprep.subr.bf16.mxu0 0
    %250 = vmatpush1.bf16.msra.mxu0 %v228
    %251 = vmatprep.subr.bf16.mxu0 0
    %252 = vmatpush1.bf16.msra.mxu0 %v227
    %253 = vmatprep.subr.bf16.mxu0 0
    %254 = vmatpush1.bf16.msra.mxu0 %v226
    %255 = vmatprep.subr.bf16.mxu0 0
    %256 = vmatpush1.bf16.msra.mxu0 %v225
    %257 = vmatprep.subr.bf16.mxu0 0
    %258 = vmatpush2.bf16.msra.mxu0 0
    %259 = vmatprep.subr.bf16.mxu0 0
    %260 = vmatpush2.bf16.msra.mxu0 0
    %261 = vmatprep.subr.bf16.mxu0 0
    %262 = vmatpush2.bf16.msra.mxu0 0
    %263 = vmatprep.subr.bf16.mxu0 0
    %264 = vmatpush2.bf16.msra.mxu0 0
    %265 = vmatprep.subr.bf16.mxu0 0
    %266 = vmatpush2.bf16.msra.mxu0 0
    %267 = vmatprep.subr.bf16.mxu0 0
    %268 = vmatpush2.bf16.msra.mxu0 0
    %269 = vmatprep.subr.bf16.mxu0 0
    %270 = vmatpush2.bf16.msra.mxu0 0
    %271 = vmatprep.subr.bf16.mxu0 0
    %272 = vmatpush2.bf16.msra.mxu0 0
    %273 = vmatprep.mubr.bf16.mxu0 0
    %274 = vmatmul.mubr.bf16.gmra.mxu0 %v169
    %v275 = vpop.f32.mrf.mxu0
    %v276 = vadd.f32 %v191, %v275
    %v277 = vpop.f32.mrf.mxu0
    %v278 = vpop.f32.mrf.mxu0
    %v279 = vadd.f32 %v191, %v278
    %v280 = vpop.f32.mrf.mxu0
    %281 = vdwg.mxu0
    %v282 = vmax.f32 %v276, 0.0
    %v283 = vmax.f32 %v279, 0.0
    %v284 = vpack.c.bf16 %v283, %v282
    %v285 = vld [vmem:[#allocation6] sm:$0xf]
    %v286 = vld [vmem:[#allocation6 + $0x4] sm:$0xf]
    %v287 = vld [vmem:[#allocation6 + $0x8] sm:$0xf]
    %v288 = vld [vmem:[#allocation6 + $0xc] sm:$0xf]
    %v289 = vld [vmem:[#allocation6 + $0x10] sm:$0xf]
    %v290 = vld [vmem:[#allocation6 + $0x14] sm:$0xf]
    %v291 = vld [vmem:[#allocation6 + $0x18] sm:$0xf]
    %v292 = vld [vmem:[#allocation6 + $0x1c] sm:$0xf]
    %v293 = vld [vmem:[#allocation6 + $0x20] sm:$0xf]
    %v294 = vld [vmem:[#allocation6 + $0x24] sm:$0xf]
    %v295 = vld [vmem:[#allocation6 + $0x28] sm:$0xf]
    %v296 = vld [vmem:[#allocation6 + $0x2c] sm:$0xf]
    %v297 = vld [vmem:[#allocation6 + $0x30] sm:$0xf]
    %v298 = vld [vmem:[#allocation6 + $0x34] sm:$0xf]
    %v299 = vld [vmem:[#allocation6 + $0x38] sm:$0xf]
    %v300 = vld [vmem:[#allocation6 + $0x3c] sm:$0xf]
    %v301 = vld [vmem:[%s6] sm:$0x1]
    %v303 = vlaneseq
    %v304 = vshrl.u32 %v303, 7
    %v305 = vsub.s32 0, %v304
    %v306 = vrot.slane %v301, %v305
    %v324 = vunpack.c.l.b16 %v285
    %v325 = vunpack.c.l.b16 %v286
    %v326 = vunpack.c.l.b16 %v287
    %v327 = vunpack.c.l.b16 %v288
    %v328 = vunpack.c.l.b16 %v289
    %v329 = vunpack.c.l.b16 %v290
    %v330 = vunpack.c.l.b16 %v291
    %v331 = vunpack.c.l.b16 %v292
    %v332 = vunpack.c.l.b16 %v293
    %v333 = vunpack.c.l.b16 %v294
    %v334 = vunpack.c.l.b16 %v295
    %v335 = vunpack.c.l.b16 %v296
    %v336 = vunpack.c.l.b16 %v297
    %v337 = vunpack.c.l.b16 %v298
    %v338 = vunpack.c.l.b16 %v299
    %v339 = vunpack.c.l.b16 %v300
    %v340 = vpack.c.b16 %v325, %v324
    %v341 = vpack.c.b16 %v327, %v326
    %v342 = vpack.c.b16 %v329, %v328
    %v343 = vpack.c.b16 %v331, %v330
    %v344 = vpack.c.b16 %v333, %v332
    %v345 = vpack.c.b16 %v335, %v334
    %v346 = vpack.c.b16 %v337, %v336
    %v347 = vpack.c.b16 %v339, %v338
    %356 = vmatprep.subr.bf16.mxu0 0
    %357 = vmatpush1.bf16.msra.mxu0 %v347
    %358 = vmatprep.subr.bf16.mxu0 0
    %359 = vmatpush1.bf16.msra.mxu0 %v346
    %360 = vmatprep.subr.bf16.mxu0 0
    %361 = vmatpush1.bf16.msra.mxu0 %v345
    %362 = vmatprep.subr.bf16.mxu0 0
    %363 = vmatpush1.bf16.msra.mxu0 %v344
    %364 = vmatprep.subr.bf16.mxu0 0
    %365 = vmatpush1.bf16.msra.mxu0 %v343
    %366 = vmatprep.subr.bf16.mxu0 0
    %367 = vmatpush1.bf16.msra.mxu0 %v342
    %368 = vmatprep.subr.bf16.mxu0 0
    %369 = vmatpush1.bf16.msra.mxu0 %v341
    %370 = vmatprep.subr.bf16.mxu0 0
    %371 = vmatpush1.bf16.msra.mxu0 %v340
    %372 = vmatprep.subr.bf16.mxu0 0
    %373 = vmatpush2.bf16.msra.mxu0 0
    %374 = vmatprep.subr.bf16.mxu0 0
    %375 = vmatpush2.bf16.msra.mxu0 0
    %376 = vmatprep.subr.bf16.mxu0 0
    %377 = vmatpush2.bf16.msra.mxu0 0
    %378 = vmatprep.subr.bf16.mxu0 0
    %379 = vmatpush2.bf16.msra.mxu0 0
    %380 = vmatprep.subr.bf16.mxu0 0
    %381 = vmatpush2.bf16.msra.mxu0 0
    %382 = vmatprep.subr.bf16.mxu0 0
    %383 = vmatpush2.bf16.msra.mxu0 0
    %384 = vmatprep.subr.bf16.mxu0 0
    %385 = vmatpush2.bf16.msra.mxu0 0
    %386 = vmatprep.subr.bf16.mxu0 0
    %387 = vmatpush2.bf16.msra.mxu0 0
    %388 = vmatprep.mubr.bf16.mxu0 0
    %389 = vmatmul.mubr.bf16.gmra.mxu0 %v284
    %v390 = vpop.f32.mrf.mxu0
    %v391 = vadd.f32 %v306, %v390
    %v392 = vpop.f32.mrf.mxu0
    %v393 = vpop.f32.mrf.mxu0
    %v394 = vadd.f32 %v306, %v393
    %v395 = vpop.f32.mrf.mxu0
    %396 = vdwg.mxu0
    %v397 = vmax.f32 %v391, 0.0
    %v398 = vmax.f32 %v394, 0.0
    %v399 = vpack.c.bf16 %v398, %v397
    %v400 = vld [vmem:[#allocation7] sm:$0xf]
    %v401 = vld [vmem:[#allocation7 + $0x4] sm:$0xf]
    %v402 = vld [vmem:[#allocation7 + $0x8] sm:$0xf]
    %v403 = vld [vmem:[#allocation7 + $0xc] sm:$0xf]
    %v404 = vld [vmem:[#allocation7 + $0x10] sm:$0xf]
    %v405 = vld [vmem:[#allocation7 + $0x14] sm:$0xf]
    %v406 = vld [vmem:[#allocation7 + $0x18] sm:$0xf]
    %v407 = vld [vmem:[#allocation7 + $0x1c] sm:$0xf]
    %v408 = vld [vmem:[#allocation7 + $0x20] sm:$0xf]
    %v409 = vld [vmem:[#allocation7 + $0x24] sm:$0xf]
    %v410 = vld [vmem:[#allocation7 + $0x28] sm:$0xf]
    %v411 = vld [vmem:[#allocation7 + $0x2c] sm:$0xf]
    %v412 = vld [vmem:[#allocation7 + $0x30] sm:$0xf]
    %v413 = vld [vmem:[#allocation7 + $0x34] sm:$0xf]
    %v414 = vld [vmem:[#allocation7 + $0x38] sm:$0xf]
    %v415 = vld [vmem:[#allocation7 + $0x3c] sm:$0xf]
    %v416 = vld [vmem:[%s8] sm:$0x1]
    %v418 = vlaneseq
    %v419 = vshrl.u32 %v418, 7
    %v420 = vsub.s32 0, %v419
    %v421 = vrot.slane %v416, %v420
    %v439 = vunpack.c.l.b16 %v400
    %v440 = vunpack.c.l.b16 %v401
    %v441 = vunpack.c.l.b16 %v402
    %v442 = vunpack.c.l.b16 %v403
    %v443 = vunpack.c.l.b16 %v404
    %v444 = vunpack.c.l.b16 %v405
    %v445 = vunpack.c.l.b16 %v406
    %v446 = vunpack.c.l.b16 %v407
    %v447 = vunpack.c.l.b16 %v408
    %v448 = vunpack.c.l.b16 %v409
    %v449 = vunpack.c.l.b16 %v410
    %v450 = vunpack.c.l.b16 %v411
    %v451 = vunpack.c.l.b16 %v412
    %v452 = vunpack.c.l.b16 %v413
    %v453 = vunpack.c.l.b16 %v414
    %v454 = vunpack.c.l.b16 %v415
    %v455 = vpack.c.b16 %v440, %v439
    %v456 = vpack.c.b16 %v442, %v441
    %v457 = vpack.c.b16 %v444, %v443
    %v458 = vpack.c.b16 %v446, %v445
    %v459 = vpack.c.b16 %v448, %v447
    %v460 = vpack.c.b16 %v450, %v449
    %v461 = vpack.c.b16 %v452, %v451
    %v462 = vpack.c.b16 %v454, %v453
    %471 = vmatprep.subr.bf16.mxu0 0
    %472 = vmatpush1.bf16.msra.mxu0 %v462
    %473 = vmatprep.subr.bf16.mxu0 0
    %474 = vmatpush1.bf16.msra.mxu0 %v461
    %475 = vmatprep.subr.bf16.mxu0 0
    %476 = vmatpush1.bf16.msra.mxu0 %v460
    %477 = vmatprep.subr.bf16.mxu0 0
    %478 = vmatpush1.bf16.msra.mxu0 %v459
    %479 = vmatprep.subr.bf16.mxu0 0
    %480 = vmatpush1.bf16.msra.mxu0 %v458
    %481 = vmatprep.subr.bf16.mxu0 0
    %482 = vmatpush1.bf16.msra.mxu0 %v457
    %483 = vmatprep.subr.bf16.mxu0 0
    %484 = vmatpush1.bf16.msra.mxu0 %v456
    %485 = vmatprep.subr.bf16.mxu0 0
    %486 = vmatpush1.bf16.msra.mxu0 %v455
    %487 = vmatprep.subr.bf16.mxu0 0
    %488 = vmatpush2.bf16.msra.mxu0 0
    %489 = vmatprep.subr.bf16.mxu0 0
    %490 = vmatpush2.bf16.msra.mxu0 0
    %491 = vmatprep.subr.bf16.mxu0 0
    %492 = vmatpush2.bf16.msra.mxu0 0
    %493 = vmatprep.subr.bf16.mxu0 0
    %494 = vmatpush2.bf16.msra.mxu0 0
    %495 = vmatprep.subr.bf16.mxu0 0
    %496 = vmatpush2.bf16.msra.mxu0 0
    %497 = vmatprep.subr.bf16.mxu0 0
    %498 = vmatpush2.bf16.msra.mxu0 0
    %499 = vmatprep.subr.bf16.mxu0 0
    %500 = vmatpush2.bf16.msra.mxu0 0
    %501 = vmatprep.subr.bf16.mxu0 0
    %502 = vmatpush2.bf16.msra.mxu0 0
    %503 = vmatprep.mubr.bf16.mxu0 0
    %504 = vmatmul.mubr.bf16.gmra.mxu0 %v399
    %v505 = vpop.f32.mrf.mxu0
    %v506 = vadd.f32 %v421, %v505
    %v507 = vpop.f32.mrf.mxu0
    %v508 = vpop.f32.mrf.mxu0
    %v509 = vadd.f32 %v421, %v508
    %v510 = vpop.f32.mrf.mxu0
    %511 = vdwg.mxu0
    %v512 = vmax.f32 %v506, 0.0
    %v513 = vmax.f32 %v509, 0.0
    %v514 = vpack.c.bf16 %v513, %v512
    %v515 = vld [vmem:[%s9] sm:$0xf]
    %v516 = vld [vmem:[%s9 + $0x4] sm:$0xf]
    %v517 = vld [vmem:[%s9 + $0x8] sm:$0xf]
    %v518 = vld [vmem:[%s9 + $0xc] sm:$0xf]
    %v519 = vld [vmem:[%s9 + $0x10] sm:$0xf]
    %v520 = vld [vmem:[%s9 + $0x14] sm:$0xf]
    %v521 = vld [vmem:[%s9 + $0x18] sm:$0xf]
    %v522 = vld [vmem:[%s9 + $0x1c] sm:$0xf]
    %v523 = vld [vmem:[%s9 + $0x20] sm:$0xf]
    %v524 = vld [vmem:[%s9 + $0x24] sm:$0xf]
    %v525 = vld [vmem:[%s9 + $0x28] sm:$0xf]
    %v526 = vld [vmem:[%s9 + $0x2c] sm:$0xf]
    %v527 = vld [vmem:[%s9 + $0x30] sm:$0xf]
    %v528 = vld [vmem:[%s9 + $0x34] sm:$0xf]
    %v529 = vld [vmem:[%s9 + $0x38] sm:$0xf]
    %v530 = vld [vmem:[%s9 + $0x3c] sm:$0xf]
    %v531 = vld [vmem:[%s10] sm:$0x1]
    %v533 = vlaneseq
    %v534 = vshrl.u32 %v533, 7
    %v535 = vsub.s32 0, %v534
    %v536 = vrot.slane %v531, %v535
    %v554 = vunpack.c.l.b16 %v515
    %v555 = vunpack.c.l.b16 %v516
    %v556 = vunpack.c.l.b16 %v517
    %v557 = vunpack.c.l.b16 %v518
    %v558 = vunpack.c.l.b16 %v519
    %v559 = vunpack.c.l.b16 %v520
    %v560 = vunpack.c.l.b16 %v521
    %v561 = vunpack.c.l.b16 %v522
    %v562 = vunpack.c.l.b16 %v523
    %v563 = vunpack.c.l.b16 %v524
    %v564 = vunpack.c.l.b16 %v525
    %v565 = vunpack.c.l.b16 %v526
    %v566 = vunpack.c.l.b16 %v527
    %v567 = vunpack.c.l.b16 %v528
    %v568 = vunpack.c.l.b16 %v529
    %v569 = vunpack.c.l.b16 %v530
    %v570 = vpack.c.b16 %v555, %v554
    %v571 = vpack.c.b16 %v557, %v556
    %v572 = vpack.c.b16 %v559, %v558
    %v573 = vpack.c.b16 %v561, %v560
    %v574 = vpack.c.b16 %v563, %v562
    %v575 = vpack.c.b16 %v565, %v564
    %v576 = vpack.c.b16 %v567, %v566
    %v577 = vpack.c.b16 %v569, %v568
    %586 = vmatprep.subr.bf16.mxu0 0
    %587 = vmatpush1.bf16.msra.mxu0 %v577
    %588 = vmatprep.subr.bf16.mxu0 0
    %589 = vmatpush1.bf16.msra.mxu0 %v576
    %590 = vmatprep.subr.bf16.mxu0 0
    %591 = vmatpush1.bf16.msra.mxu0 %v575
    %592 = vmatprep.subr.bf16.mxu0 0
    %593 = vmatpush1.bf16.msra.mxu0 %v574
    %594 = vmatprep.subr.bf16.mxu0 0
    %595 = vmatpush1.bf16.msra.mxu0 %v573
    %596 = vmatprep.subr.bf16.mxu0 0
    %597 = vmatpush1.bf16.msra.mxu0 %v572
    %598 = vmatprep.subr.bf16.mxu0 0
    %599 = vmatpush1.bf16.msra.mxu0 %v571
    %600 = vmatprep.subr.bf16.mxu0 0
    %601 = vmatpush1.bf16.msra.mxu0 %v570
    %602 = vmatprep.subr.bf16.mxu0 0
    %603 = vmatpush2.bf16.msra.mxu0 0
    %604 = vmatprep.subr.bf16.mxu0 0
    %605 = vmatpush2.bf16.msra.mxu0 0
    %606 = vmatprep.subr.bf16.mxu0 0
    %607 = vmatpush2.bf16.msra.mxu0 0
    %608 = vmatprep.subr.bf16.mxu0 0
    %609 = vmatpush2.bf16.msra.mxu0 0
    %610 = vmatprep.subr.bf16.mxu0 0
    %611 = vmatpush2.bf16.msra.mxu0 0
    %612 = vmatprep.subr.bf16.mxu0 0
    %613 = vmatpush2.bf16.msra.mxu0 0
    %614 = vmatprep.subr.bf16.mxu0 0
    %615 = vmatpush2.bf16.msra.mxu0 0
    %616 = vmatprep.subr.bf16.mxu0 0
    %617 = vmatpush2.bf16.msra.mxu0 0
    %618 = vmatprep.mubr.bf16.mxu0 0
    %619 = vmatmul.mubr.bf16.gmra.mxu0 %v514
    %v620 = vpop.f32.mrf.mxu0
    %v621 = vadd.f32 %v536, %v620
    %v622 = vpop.f32.mrf.mxu0
    %v623 = vpop.f32.mrf.mxu0
    %v624 = vadd.f32 %v536, %v623
    %v625 = vpop.f32.mrf.mxu0
    %626 = vdwg.mxu0
    %v627 = vlaneseq
    %v628 = vand.u32 %v627, 127
    %vm629 = vcmp.lt.s32.totalorder %v628, 2
    %v630 = vsel %vm629, %v621, -1e+30
    %v631 = vsel %vm629, %v624, -1e+30
    %vm632 = vcmask 64512
    %v633 = vsel %vm632, %v630, -inf
    %634 = vmax.xlane.f32.xlu0 %v633
    %v635 = vpop.xlane.xlu0 %634
    %v636 = vsel %vm632, %v631, -inf
    %637 = vmax.xlane.f32.xlu0 %v636
    %v638 = vpop.xlane.xlu0 %637
    %v639 = vsub.f32 %v630, %v635
    %v640 = vsub.f32 %v631, %v638
    %v641 = vmul.f32 %v639, 1.442695
    %v642 = vpow.pop %v641
    %v643 = vmul.f32 %v640, 1.442695
    %v644 = vpow.pop %v643
    %v645 = vsel %vm632, %v642, 0.0
    %646 = vadd.xlane.f32.xlu0 %v645
    %v647 = vpop.xlane.xlu0 %646
    %v648 = vsel %vm632, %v644, 0.0
    %649 = vadd.xlane.f32.xlu0 %v648
    %v650 = vpop.xlane.xlu0 %649
    %v651 = vlog2.pop %v647
    %v652 = vmul.f32 %v651, 0.6931472
    %v653 = vlog2.pop %v650
    %v654 = vmul.f32 %v653, 0.6931472
    %v655 = vadd.f32 %v652, %v635
    %v656 = vadd.f32 %v654, %v638
    %v657 = vsub.f32 %v621, %v655
    %v658 = vsub.f32 %v624, %v656
    %659 = vst.msk [vmem:[%s11] sm:$0xff] %vm632, %v657
    %660 = vst.msk [vmem:[%s11 + $0x8] sm:$0xff] %vm632, %v658
    // Predicated region
    $region62: #{tpu_custom_call.1} parent=1 // pred_check
      _
    $region63: #{tpu_custom_call.1} parent=1 // pred_check_branch
      %662 = sbr.rel (0) target = $region65
    $region64: #{tpu_custom_call.1} parent=1 // pred_region
      _
    $region65: #{tpu_custom_call.1} parent=1 // pred_fallthru
      _
    // Predicated region
    $region66: #{tpu_custom_call.1} parent=1 // pred_check
      _
    $region67: #{tpu_custom_call.1} parent=1 // pred_check_branch
      %664 = sbr.rel (0) target = $region69
    $region68: #{tpu_custom_call.1} parent=1 // pred_region
      _
    $region69: #{tpu_custom_call.1} parent=1 // pred_fallthru
      _
    %665 = vsyncpa [#allocation3], 1
    %666 = vsyncpa [#allocation5], 1
    %667 = vsyncpa [#allocation8], 1

</llo_original>
